<compile_context>
chip_gen: v5e
topology: v5e:2x2
jax: 0.10.0
libtpu: 0.0.40
codegen_flags: <defaults>
</compile_context>

<pallas_src>
import functools

import jax
import jax.numpy as jnp
from jax import lax
from jax.experimental import pallas as pl
from jax.experimental.pallas import tpu as pltpu


def _round_up(x, m):
    return ((x + m - 1) // m) * m


def _full_spec(arr):
    """Whole-array block, resident across the vocab grid (constant block index)."""
    nd = arr.ndim
    return pl.BlockSpec(arr.shape, lambda v, _nd=nd: (0,) * _nd)


# --------------------------------------------------------------------------------------
# Fused kernel: attention + LSTM stack (grid step 0) + vocab-tiled fc_out (every step)
# --------------------------------------------------------------------------------------
def _fused_decoder_kernel(n_layers, seq_len, *refs):
    n_w = 4 + 3 * (n_layers - 1)
    emb_ref, h_ref, c_ref, enc_ref = refs[:4]
    w_refs = refs[4:4 + n_w]
    fcw_ref = refs[4 + n_w]
    fcb_ref = refs[5 + n_w]
    h_out, c_out, attn_out, pred_out = refs[6 + n_w:10 + n_w]
    h_top = refs[10 + n_w]                     # bf16 [B, H] scratch, persists over grid

    H = h_ref.shape[-1]

    @pl.when(pl.program_id(0) == 0)
    def _state_step():
        emb = emb_ref[...]                     # [B, E] f32
        enc = enc_ref[...]                     # [B, S_pad, H] f32
        # Load the recurrent state before any (aliased) output write.
        h_all = h_ref[...]                     # [L, B, H] f32
        c_all = c_ref[...]                     # [L, B, H] f32

        # ---- dot-product (Luong) attention on the MXU --------------------------------
        q3 = h_all[n_layers - 1][:, None, :]                               # [B, 1, H]
        scores = jnp.einsum('bqh,bsh->bqs', q3, enc,
                            preferred_element_type=jnp.float32)            # [B, 1, S_pad]
        col = lax.broadcasted_iota(jnp.int32, scores.shape, 2)
        scores = jnp.where(col < seq_len, scores, jnp.float32(-1e30))      # mask padding
        m = jnp.max(scores, axis=-1, keepdims=True)
        p = jnp.exp(scores - m)
        weights = p / jnp.sum(p, axis=-1, keepdims=True)                   # exact softmax
        attn_out[...] = weights[:, 0, :].astype(attn_out.dtype)
        context = jnp.einsum('bqs,bsh->bqh', weights, enc,
                             preferred_element_type=jnp.float32)[:, 0, :]  # [B, H]

        # ---- single-timestep LSTM stack: gate-fused [in, 4H] bf16 weights ------------
        def mm(x, w_ref_):
            return jnp.dot(x.astype(jnp.bfloat16), w_ref_[...],
                           preferred_element_type=jnp.float32)

        x = None
        wi = 0
        for l in range(n_layers):
            h_prev = h_all[l]                                              # [B, H]
            c_prev = c_all[l]                                              # [B, H]
            if l == 0:
                pre = (mm(emb, w_refs[wi]) + mm(context, w_refs[wi + 1])
                       + mm(h_prev, w_refs[wi + 2]) + w_refs[wi + 3][...])
                wi += 4
            else:
                pre = (mm(x, w_refs[wi]) + mm(h_prev, w_refs[wi + 1])
                       + w_refs[wi + 2][...])
                wi += 3
            # Gate order matches PyTorch nn.LSTM: (i, f, g, o); static slices at mult. of H.
            i_g = jax.nn.sigmoid(pre[:, 0 * H:1 * H])
            f_g = jax.nn.sigmoid(pre[:, 1 * H:2 * H])
            g_g = jnp.tanh(pre[:, 2 * H:3 * H])
            o_g = jax.nn.sigmoid(pre[:, 3 * H:4 * H])
            c_new = f_g * c_prev + i_g * g_g
            h_new = o_g * jnp.tanh(c_new)
            h_out[l] = h_new.astype(h_out.dtype)
            c_out[l] = c_new.astype(c_out.dtype)
            x = h_new

        h_top[...] = x.astype(h_top.dtype)     # bf16 activations feed fc tiles directly

    # ---- fc_out vocab tile (every grid step): bf16 x streamed bf16 weight tile --------
    pred_out[...] = (jnp.dot(h_top[...], fcw_ref[...],
                             preferred_element_type=jnp.float32)
                     + fcb_ref[...]).astype(pred_out.dtype)


# --------------------------------------------------------------------------------------
# One-time prep (hoisted out of the per-token decode step)
# --------------------------------------------------------------------------------------
def prepare_decoder_params(params, n_layers, embed_dim, hidden_dim, *, fc_tile_v=1024):
    """Build gate-fused bf16 LSTM weights, bf16 lane-padded fc_out weights and f32 biases
    ONCE (at model init), so no weight copy/cast/pad is re-materialized per decode step."""
    E = embed_dim
    lstm = []
    for l in range(n_layers):
        w_ih = params[f'w_ih_{l}']             # [in, 4H]
        w_hh = params[f'w_hh_{l}']             # [H, 4H]
        b = params[f'b_{l}']                   # [1, 4H]
        if l == 0:
            # Split layer-0 input weights into embedding / context halves so the kernel
            # needs no lane-dim concatenate of (embedded, context).
            lstm += [w_ih[:E].astype(jnp.bfloat16), w_ih[E:].astype(jnp.bfloat16)]
        else:
            lstm += [w_ih.astype(jnp.bfloat16)]
        lstm += [w_hh.astype(jnp.bfloat16), b.astype(jnp.float32)]

    V = params['fc_w'].shape[1]
    tile_v = min(fc_tile_v, _round_up(V, 128))
    V_pad = _round_up(V, tile_v)
    fc_w = jnp.pad(params['fc_w'], ((0, 0), (0, V_pad - V))).astype(jnp.bfloat16)
    fc_b = jnp.pad(params['fc_b'], ((0, 0), (0, V_pad - V))).astype(jnp.float32)

    prepped = {'embedding': params['embedding'], 'lstm': lstm, 'fc_w': fc_w, 'fc_b': fc_b}
    static = {'n_layers': n_layers, 'vocab_size': V, 'tile_v': tile_v}
    return prepped, static


def prepare_encoder_outputs(encoder_outputs):
    """Pad the encoder sequence axis to a lane-dense multiple of 128 once per sequence
    (masked inside the kernel), instead of per decode step."""
    _, S, _ = encoder_outputs.shape
    S_pad = _round_up(S, 128)
    return jnp.pad(encoder_outputs, ((0, 0), (0, S_pad - S), (0, 0))), S


# --------------------------------------------------------------------------------------
# Per-token decode step
# --------------------------------------------------------------------------------------
def dance_decoder_step(prepped, input_token, decoder_hidden, decoder_cell, enc_pad,
                       *, seq_len, n_layers, vocab_size, tile_v):
    L, B, H = decoder_hidden.shape
    S_pad = enc_pad.shape[1]
    V_pad = prepped['fc_w'].shape[1]

    # Glue: embedding gather (input.unsqueeze(1) -> embed -> squeeze back to [B, E]).
    embedded = prepped['embedding'][input_token]
    # TODO(synk): dropout is identity (eval-mode semantics).

    state_inputs = [embedded, decoder_hidden, decoder_cell, enc_pad] + list(prepped['lstm'])
    in_specs = [_full_spec(a) for a in state_inputs]
    in_specs += [pl.BlockSpec((H, tile_v), lambda v: (0, v)),    # streamed fc weight tile
                 pl.BlockSpec((1, tile_v), lambda v: (0, v))]    # fc bias tile

    out_shape = (
        jax.ShapeDtypeStruct((L, B, H), jnp.float32),            # new hidden (in place)
        jax.ShapeDtypeStruct((L, B, H), jnp.float32),            # new cell   (in place)
        jax.ShapeDtypeStruct((B, S_pad), jnp.float32),           # attention weights (padded)
        jax.ShapeDtypeStruct((B, V_pad), jnp.float32),           # logits (padded)
    )
    out_specs = (
        pl.BlockSpec((L, B, H), lambda v: (0, 0, 0)),
        pl.BlockSpec((L, B, H), lambda v: (0, 0, 0)),
        pl.BlockSpec((B, S_pad), lambda v: (0, 0)),
        pl.BlockSpec((B, tile_v), lambda v: (0, v)),             # lane-dense logit slab
    )

    h_new, c_new, attn_pad, pred_pad = pl.pallas_call(
        functools.partial(_fused_decoder_kernel, n_layers, seq_len),
        out_shape=out_shape,
        grid=(V_pad // tile_v,),
        in_specs=in_specs,
        out_specs=out_specs,
        scratch_shapes=[pltpu.VMEM((B, H), jnp.bfloat16)],       # top-layer hidden (bf16)
        # Write the recurrent state in place (caller donates decoder_hidden/cell).
        input_output_aliases={1: 0, 2: 1},
        compiler_params=pltpu.CompilerParams(
            # Vocab axis is 'arbitrary': step 0 computes the recurrent state that later
            # fc tiles consume from VMEM scratch.
            dimension_semantics=("arbitrary",),
            vmem_limit_bytes=32 * 1024 * 1024),
    )(*state_inputs, prepped['fc_w'], prepped['fc_b'])

    # Consumers that accept padded outputs can skip these slices.
    prediction = pred_pad[:, :vocab_size]
    attention_weights = attn_pad[:, :seq_len]
    return prediction, h_new, c_new, attention_weights


if __name__ == "__main__":
    # Small shapes consistent with the module's forward.
    V, E, H, L = 16, 32, 32, 2     # vocab, embed_dim, hidden_dim, n_layers
    B, S = 2, 8                    # batch, encoder sequence length

    key = jax.random.PRNGKey(0)
    keys = list(jax.random.split(key, 16))
    nxt = iter(keys).__next__

    params = {'embedding': jax.random.normal(nxt(), (V, E), jnp.float32) * 0.1}
    for l in range(L):
        in_dim = E + H if l == 0 else H
        params[f'w_ih_{l}'] = jax.random.normal(nxt(), (in_dim, 4 * H), jnp.float32) * 0.1
        params[f'w_hh_{l}'] = jax.random.normal(nxt(), (H, 4 * H), jnp.float32) * 0.1
        params[f'b_{l}'] = jax.random.normal(nxt(), (1, 4 * H), jnp.float32) * 0.1
    params['fc_w'] = jax.random.normal(nxt(), (H, V), jnp.float32) * 0.1
    params['fc_b'] = jax.random.normal(nxt(), (1, V), jnp.float32) * 0.1

    input_token = jax.random.randint(nxt(), (B,), 0, V, dtype=jnp.int32)
    decoder_hidden = jax.random.normal(nxt(), (L, B, H), jnp.float32)
    decoder_cell = jax.random.normal(nxt(), (L, B, H), jnp.float32)
    encoder_outputs = jax.random.normal(nxt(), (B, S, H), jnp.float32)

    # One-time prep (hoisted out of the decode loop).
    prepped, cfg = prepare_decoder_params(params, L, E, H, fc_tile_v=1024)
    enc_pad, seq_len = prepare_encoder_outputs(encoder_outputs)

    step = jax.jit(
        functools.partial(dance_decoder_step, seq_len=seq_len, **cfg),
        donate_argnums=(2, 3))     # recurrent state is updated in place

    pred, hid, cell, attn = step(prepped, input_token, decoder_hidden, decoder_cell, enc_pad)
    jax.block_until_ready((pred, hid, cell, attn))

    assert pred.shape == (B, V)
    assert hid.shape == (L, B, H)
    assert cell.shape == (L, B, H)
    assert attn.shape == (B, S)
    print("KERNEL_OK")
</pallas_src>

<mosaic_0001>
module attributes {stable_mosaic.version = 11 : i64} {
  func.func @_fused_decoder_kernel(%arg0: i32, %arg1: memref<2x32xf32, #tpu.memory_space<vmem>>, %arg2: memref<2x2x32xf32, #tpu.memory_space<vmem>>, %arg3: memref<2x2x32xf32, #tpu.memory_space<vmem>>, %arg4: memref<2x128x32xf32, #tpu.memory_space<vmem>>, %arg5: memref<32x128xbf16, #tpu.memory_space<vmem>>, %arg6: memref<32x128xbf16, #tpu.memory_space<vmem>>, %arg7: memref<32x128xbf16, #tpu.memory_space<vmem>>, %arg8: memref<1x128xf32, #tpu.memory_space<vmem>>, %arg9: memref<32x128xbf16, #tpu.memory_space<vmem>>, %arg10: memref<32x128xbf16, #tpu.memory_space<vmem>>, %arg11: memref<1x128xf32, #tpu.memory_space<vmem>>, %arg12: memref<32x128xbf16, #tpu.memory_space<vmem>>, %arg13: memref<1x128xf32, #tpu.memory_space<vmem>>, %arg14: memref<2x2x32xf32, #tpu.memory_space<vmem>>, %arg15: memref<2x2x32xf32, #tpu.memory_space<vmem>>, %arg16: memref<2x128xf32, #tpu.memory_space<vmem>>, %arg17: memref<2x128xf32, #tpu.memory_space<vmem>>, %arg18: memref<2x32xbf16, #tpu.memory_space<vmem>>) attributes {dimension_semantics = [#tpu.dimension_semantics<arbitrary>], iteration_bounds = array<i64: 1>, scalar_prefetch = 0 : i64, scratch_operands = 1 : i64, tpu.core_type = #tpu.core_type<tc>, window_params = [{pipeline_mode = #tpu.pipeline_mode<synchronous>, transform_indices = @transform_0, window_bounds = array<i64: 2, 32>}, {pipeline_mode = #tpu.pipeline_mode<synchronous>, transform_indices = @transform_1, window_bounds = array<i64: 2, 2, 32>}, {pipeline_mode = #tpu.pipeline_mode<synchronous>, transform_indices = @transform_2, window_bounds = array<i64: 2, 2, 32>}, {pipeline_mode = #tpu.pipeline_mode<synchronous>, transform_indices = @transform_3, window_bounds = array<i64: 2, 128, 32>}, {pipeline_mode = #tpu.pipeline_mode<synchronous>, transform_indices = @transform_4, window_bounds = array<i64: 32, 128>}, {pipeline_mode = #tpu.pipeline_mode<synchronous>, transform_indices = @transform_5, window_bounds = array<i64: 32, 128>}, {pipeline_mode = #tpu.pipeline_mode<synchronous>, transform_indices = @transform_6, window_bounds = array<i64: 32, 128>}, {pipeline_mode = #tpu.pipeline_mode<synchronous>, transform_indices = @transform_7, window_bounds = array<i64: 1, 128>}, {pipeline_mode = #tpu.pipeline_mode<synchronous>, transform_indices = @transform_8, window_bounds = array<i64: 32, 128>}, {pipeline_mode = #tpu.pipeline_mode<synchronous>, transform_indices = @transform_9, window_bounds = array<i64: 32, 128>}, {pipeline_mode = #tpu.pipeline_mode<synchronous>, transform_indices = @transform_10, window_bounds = array<i64: 1, 128>}, {transform_indices = @transform_11, window_bounds = array<i64: 32, 128>}, {transform_indices = @transform_12, window_bounds = array<i64: 1, 128>}, {pipeline_mode = #tpu.pipeline_mode<synchronous>, transform_indices = @transform_13, window_bounds = array<i64: 2, 2, 32>}, {pipeline_mode = #tpu.pipeline_mode<synchronous>, transform_indices = @transform_14, window_bounds = array<i64: 2, 2, 32>}, {pipeline_mode = #tpu.pipeline_mode<synchronous>, transform_indices = @transform_15, window_bounds = array<i64: 2, 128>}, {transform_indices = @transform_16, window_bounds = array<i64: 2, 128>}]} {
    %c0_i32 = arith.constant 0 : i32
    %0 = arith.cmpi eq, %arg0, %c0_i32 : i32
    %1 = arith.extui %0 : i1 to i32
    %c0_i32_0 = arith.constant 0 : i32
    %2 = arith.cmpi ne, %1, %c0_i32_0 : i32
    scf.if %2 {
      %c0_8 = arith.constant 0 : index
      %c0_9 = arith.constant 0 : index
      %10 = vector.load %arg1[%c0_8, %c0_9] : memref<2x32xf32, #tpu.memory_space<vmem>>, vector<2x32xf32>
      %c0_10 = arith.constant 0 : index
      %c0_11 = arith.constant 0 : index
      %c0_12 = arith.constant 0 : index
      %11 = vector.load %arg4[%c0_10, %c0_11, %c0_12] : memref<2x128x32xf32, #tpu.memory_space<vmem>>, vector<2x128x32xf32>
      %c0_13 = arith.constant 0 : index
      %c0_14 = arith.constant 0 : index
      %c0_15 = arith.constant 0 : index
      %12 = vector.load %arg2[%c0_13, %c0_14, %c0_15] : memref<2x2x32xf32, #tpu.memory_space<vmem>>, vector<2x2x32xf32>
      %c0_16 = arith.constant 0 : index
      %c0_17 = arith.constant 0 : index
      %c0_18 = arith.constant 0 : index
      %13 = vector.load %arg3[%c0_16, %c0_17, %c0_18] : memref<2x2x32xf32, #tpu.memory_space<vmem>>, vector<2x2x32xf32>
      %14 = vector.extract_strided_slice %12 {offsets = [1, 0, 0], sizes = [1, 2, 32], strides = [1, 1, 1]} : vector<2x2x32xf32> to vector<1x2x32xf32>
      %15 = vector.shape_cast %14 : vector<1x2x32xf32> to vector<2x32xf32>
      %16 = vector.shape_cast %15 : vector<2x32xf32> to vector<2x1x32xf32>
      "tpu.trace_start"() <{level = 10 : i32, message = "bqh,bsh->bqs"}> : () -> ()
      %cst_19 = arith.constant dense<0.000000e+00> : vector<2x1x128xf32>
      %17 = tpu.matmul %16, %11, %cst_19 {dimension_numbers = #tpu.dot_dimension_numbers<[2], [2], [1], [1], [0, 0, 0, 1, 1, 1], [0], [0]>} : vector<2x1x32xf32>, vector<2x128x32xf32>, vector<2x1x128xf32> -> vector<2x1x128xf32>
      "tpu.trace_stop"() : () -> ()
      %18 = tpu.iota {dimensions = array<i32: 2>} : vector<2x1x128xi32>
      %c8_i32 = arith.constant 8 : i32
      %19 = vector.broadcast %c8_i32 : i32 to vector<2x1x128xi32>
      %20 = arith.cmpi slt, %18, %19 : vector<2x1x128xi32>
      %cst_20 = arith.constant -1.000000e+30 : f32
      %21 = vector.broadcast %cst_20 : f32 to vector<2x1x128xf32>
      %22 = arith.select %20, %17, %21 : vector<2x1x128xi1>, vector<2x1x128xf32>
      %cst_21 = arith.constant dense<0xFF800000> : vector<2x1xf32>
      %23 = vector.multi_reduction <maximumf>, %22, %cst_21 [2] : vector<2x1x128xf32> to vector<2x1xf32>
      %24 = vector.shape_cast %23 : vector<2x1xf32> to vector<2x1x1xf32>
      %25 = vector.broadcast %24 : vector<2x1x1xf32> to vector<2x1x128xf32>
      %26 = arith.subf %22, %25 : vector<2x1x128xf32>
      %27 = math.exp %26 : vector<2x1x128xf32>
      %cst_22 = arith.constant dense<0.000000e+00> : vector<2x1xf32>
      %28 = vector.multi_reduction <add>, %27, %cst_22 [2] : vector<2x1x128xf32> to vector<2x1xf32>
      %29 = vector.shape_cast %28 : vector<2x1xf32> to vector<2x1x1xf32>
      %30 = vector.broadcast %29 : vector<2x1x1xf32> to vector<2x1x128xf32>
      %31 = arith.divf %27, %30 : vector<2x1x128xf32>
      %32 = vector.shape_cast %31 : vector<2x1x128xf32> to vector<2x128xf32>
      %c0_23 = arith.constant 0 : index
      %c0_24 = arith.constant 0 : index
      %33 = vector.load %arg16[%c0_23, %c0_24] : memref<2x128xf32, #tpu.memory_space<vmem>>, vector<2x128xf32>
      tpu.vector_store %arg16[%c0_23, %c0_24], %32 {strides = array<i32>} : memref<2x128xf32, #tpu.memory_space<vmem>>, vector<2x128xf32>,
      "tpu.trace_start"() <{level = 10 : i32, message = "bqs,bsh->bqh"}> : () -> ()
      %cst_25 = arith.constant dense<0.000000e+00> : vector<2x1x32xf32>
      %34 = tpu.matmul %31, %11, %cst_25 {dimension_numbers = #tpu.dot_dimension_numbers<[2], [1], [1], [2], [0, 0, 0, 1, 1, 2], [0], [0]>} : vector<2x1x128xf32>, vector<2x128x32xf32>, vector<2x1x32xf32> -> vector<2x1x32xf32>
      "tpu.trace_stop"() : () -> ()
      %35 = vector.shape_cast %34 : vector<2x1x32xf32> to vector<2x32xf32>
      %36 = vector.extract_strided_slice %12 {offsets = [0, 0, 0], sizes = [1, 2, 32], strides = [1, 1, 1]} : vector<2x2x32xf32> to vector<1x2x32xf32>
      %37 = vector.shape_cast %36 : vector<1x2x32xf32> to vector<2x32xf32>
      %38 = vector.extract_strided_slice %13 {offsets = [0, 0, 0], sizes = [1, 2, 32], strides = [1, 1, 1]} : vector<2x2x32xf32> to vector<1x2x32xf32>
      %39 = vector.shape_cast %38 : vector<1x2x32xf32> to vector<2x32xf32>
      %40 = arith.truncf %10 : vector<2x32xf32> to vector<2x32xbf16>
      %c0_26 = arith.constant 0 : index
      %c0_27 = arith.constant 0 : index
      %41 = vector.load %arg5[%c0_26, %c0_27] : memref<32x128xbf16, #tpu.memory_space<vmem>>, vector<32x128xbf16>
      %cst_28 = arith.constant dense<0.000000e+00> : vector<2x128xf32>
      %42 = tpu.matmul %40, %41, %cst_28 {dimension_numbers = #tpu.dot_dimension_numbers<[1], [0], [0], [1], [0, 0, 1, 1], [], []>} : vector<2x32xbf16>, vector<32x128xbf16>, vector<2x128xf32> -> vector<2x128xf32>
      %43 = arith.truncf %35 : vector<2x32xf32> to vector<2x32xbf16>
      %c0_29 = arith.constant 0 : index
      %c0_30 = arith.constant 0 : index
      %44 = vector.load %arg6[%c0_29, %c0_30] : memref<32x128xbf16, #tpu.memory_space<vmem>>, vector<32x128xbf16>
      %cst_31 = arith.constant dense<0.000000e+00> : vector<2x128xf32>
      %45 = tpu.matmul %43, %44, %cst_31 {dimension_numbers = #tpu.dot_dimension_numbers<[1], [0], [0], [1], [0, 0, 1, 1], [], []>} : vector<2x32xbf16>, vector<32x128xbf16>, vector<2x128xf32> -> vector<2x128xf32>
      %46 = arith.addf %42, %45 : vector<2x128xf32>
      %47 = arith.truncf %37 : vector<2x32xf32> to vector<2x32xbf16>
      %c0_32 = arith.constant 0 : index
      %c0_33 = arith.constant 0 : index
      %48 = vector.load %arg7[%c0_32, %c0_33] : memref<32x128xbf16, #tpu.memory_space<vmem>>, vector<32x128xbf16>
      %cst_34 = arith.constant dense<0.000000e+00> : vector<2x128xf32>
      %49 = tpu.matmul %47, %48, %cst_34 {dimension_numbers = #tpu.dot_dimension_numbers<[1], [0], [0], [1], [0, 0, 1, 1], [], []>} : vector<2x32xbf16>, vector<32x128xbf16>, vector<2x128xf32> -> vector<2x128xf32>
      %50 = arith.addf %46, %49 : vector<2x128xf32>
      %c0_35 = arith.constant 0 : index
      %c0_36 = arith.constant 0 : index
      %51 = vector.load %arg8[%c0_35, %c0_36] : memref<1x128xf32, #tpu.memory_space<vmem>>, vector<1x128xf32>
      %52 = vector.broadcast %51 : vector<1x128xf32> to vector<2x128xf32>
      %53 = arith.addf %50, %52 : vector<2x128xf32>
      %54 = vector.extract_strided_slice %53 {offsets = [0, 0], sizes = [2, 32], strides = [1, 1]} : vector<2x128xf32> to vector<2x32xf32>
      %55 = arith.negf %54 : vector<2x32xf32>
      %56 = math.exp %55 : vector<2x32xf32>
      %cst_37 = arith.constant 1.000000e+00 : f32
      %57 = vector.broadcast %cst_37 : f32 to vector<2x32xf32>
      %58 = arith.addf %57, %56 : vector<2x32xf32>
      %59 = arith.divf %57, %58 : vector<2x32xf32>
      %60 = vector.extract_strided_slice %53 {offsets = [0, 32], sizes = [2, 32], strides = [1, 1]} : vector<2x128xf32> to vector<2x32xf32>
      %61 = arith.negf %60 : vector<2x32xf32>
      %62 = math.exp %61 : vector<2x32xf32>
      %cst_38 = arith.constant 1.000000e+00 : f32
      %63 = vector.broadcast %cst_38 : f32 to vector<2x32xf32>
      %64 = arith.addf %63, %62 : vector<2x32xf32>
      %65 = arith.divf %63, %64 : vector<2x32xf32>
      %66 = vector.extract_strided_slice %53 {offsets = [0, 64], sizes = [2, 32], strides = [1, 1]} : vector<2x128xf32> to vector<2x32xf32>
      %67 = math.tanh %66 : vector<2x32xf32>
      %68 = vector.extract_strided_slice %53 {offsets = [0, 96], sizes = [2, 32], strides = [1, 1]} : vector<2x128xf32> to vector<2x32xf32>
      %69 = arith.negf %68 : vector<2x32xf32>
      %70 = math.exp %69 : vector<2x32xf32>
      %cst_39 = arith.constant 1.000000e+00 : f32
      %71 = vector.broadcast %cst_39 : f32 to vector<2x32xf32>
      %72 = arith.addf %71, %70 : vector<2x32xf32>
      %73 = arith.divf %71, %72 : vector<2x32xf32>
      %74 = arith.mulf %65, %39 : vector<2x32xf32>
      %75 = arith.mulf %59, %67 : vector<2x32xf32>
      %76 = arith.addf %74, %75 : vector<2x32xf32>
      %77 = math.tanh %76 : vector<2x32xf32>
      %78 = arith.mulf %73, %77 : vector<2x32xf32>
      %c0_40 = arith.constant 0 : index
      %c0_41 = arith.constant 0 : index
      %c0_42 = arith.constant 0 : index
      %79 = vector.load %arg14[%c0_40, %c0_41, %c0_42] : memref<2x2x32xf32, #tpu.memory_space<vmem>>, vector<1x2x32xf32>
      %80 = vector.shape_cast %79 : vector<1x2x32xf32> to vector<2x32xf32>
      %81 = vector.shape_cast %78 : vector<2x32xf32> to vector<1x2x32xf32>
      tpu.vector_store %arg14[%c0_40, %c0_41, %c0_42], %81 {strides = array<i32>} : memref<2x2x32xf32, #tpu.memory_space<vmem>>, vector<1x2x32xf32>,
      %c0_43 = arith.constant 0 : index
      %c0_44 = arith.constant 0 : index
      %c0_45 = arith.constant 0 : index
      %82 = vector.load %arg15[%c0_43, %c0_44, %c0_45] : memref<2x2x32xf32, #tpu.memory_space<vmem>>, vector<1x2x32xf32>
      %83 = vector.shape_cast %82 : vector<1x2x32xf32> to vector<2x32xf32>
      %84 = vector.shape_cast %76 : vector<2x32xf32> to vector<1x2x32xf32>
      tpu.vector_store %arg15[%c0_43, %c0_44, %c0_45], %84 {strides = array<i32>} : memref<2x2x32xf32, #tpu.memory_space<vmem>>, vector<1x2x32xf32>,
      %85 = vector.extract_strided_slice %12 {offsets = [1, 0, 0], sizes = [1, 2, 32], strides = [1, 1, 1]} : vector<2x2x32xf32> to vector<1x2x32xf32>
      %86 = vector.shape_cast %85 : vector<1x2x32xf32> to vector<2x32xf32>
      %87 = vector.extract_strided_slice %13 {offsets = [1, 0, 0], sizes = [1, 2, 32], strides = [1, 1, 1]} : vector<2x2x32xf32> to vector<1x2x32xf32>
      %88 = vector.shape_cast %87 : vector<1x2x32xf32> to vector<2x32xf32>
      %89 = arith.truncf %78 : vector<2x32xf32> to vector<2x32xbf16>
      %c0_46 = arith.constant 0 : index
      %c0_47 = arith.constant 0 : index
      %90 = vector.load %arg9[%c0_46, %c0_47] : memref<32x128xbf16, #tpu.memory_space<vmem>>, vector<32x128xbf16>
      %cst_48 = arith.constant dense<0.000000e+00> : vector<2x128xf32>
      %91 = tpu.matmul %89, %90, %cst_48 {dimension_numbers = #tpu.dot_dimension_numbers<[1], [0], [0], [1], [0, 0, 1, 1], [], []>} : vector<2x32xbf16>, vector<32x128xbf16>, vector<2x128xf32> -> vector<2x128xf32>
      %92 = arith.truncf %86 : vector<2x32xf32> to vector<2x32xbf16>
      %c0_49 = arith.constant 0 : index
      %c0_50 = arith.constant 0 : index
      %93 = vector.load %arg10[%c0_49, %c0_50] : memref<32x128xbf16, #tpu.memory_space<vmem>>, vector<32x128xbf16>
      %cst_51 = arith.constant dense<0.000000e+00> : vector<2x128xf32>
      %94 = tpu.matmul %92, %93, %cst_51 {dimension_numbers = #tpu.dot_dimension_numbers<[1], [0], [0], [1], [0, 0, 1, 1], [], []>} : vector<2x32xbf16>, vector<32x128xbf16>, vector<2x128xf32> -> vector<2x128xf32>
      %95 = arith.addf %91, %94 : vector<2x128xf32>
      %c0_52 = arith.constant 0 : index
      %c0_53 = arith.constant 0 : index
      %96 = vector.load %arg11[%c0_52, %c0_53] : memref<1x128xf32, #tpu.memory_space<vmem>>, vector<1x128xf32>
      %97 = vector.broadcast %96 : vector<1x128xf32> to vector<2x128xf32>
      %98 = arith.addf %95, %97 : vector<2x128xf32>
      %99 = vector.extract_strided_slice %98 {offsets = [0, 0], sizes = [2, 32], strides = [1, 1]} : vector<2x128xf32> to vector<2x32xf32>
      %100 = arith.negf %99 : vector<2x32xf32>
      %101 = math.exp %100 : vector<2x32xf32>
      %cst_54 = arith.constant 1.000000e+00 : f32
      %102 = vector.broadcast %cst_54 : f32 to vector<2x32xf32>
      %103 = arith.addf %102, %101 : vector<2x32xf32>
      %104 = arith.divf %102, %103 : vector<2x32xf32>
      %105 = vector.extract_strided_slice %98 {offsets = [0, 32], sizes = [2, 32], strides = [1, 1]} : vector<2x128xf32> to vector<2x32xf32>
      %106 = arith.negf %105 : vector<2x32xf32>
      %107 = math.exp %106 : vector<2x32xf32>
      %cst_55 = arith.constant 1.000000e+00 : f32
      %108 = vector.broadcast %cst_55 : f32 to vector<2x32xf32>
      %109 = arith.addf %108, %107 : vector<2x32xf32>
      %110 = arith.divf %108, %109 : vector<2x32xf32>
      %111 = vector.extract_strided_slice %98 {offsets = [0, 64], sizes = [2, 32], strides = [1, 1]} : vector<2x128xf32> to vector<2x32xf32>
      %112 = math.tanh %111 : vector<2x32xf32>
      %113 = vector.extract_strided_slice %98 {offsets = [0, 96], sizes = [2, 32], strides = [1, 1]} : vector<2x128xf32> to vector<2x32xf32>
      %114 = arith.negf %113 : vector<2x32xf32>
      %115 = math.exp %114 : vector<2x32xf32>
      %cst_56 = arith.constant 1.000000e+00 : f32
      %116 = vector.broadcast %cst_56 : f32 to vector<2x32xf32>
      %117 = arith.addf %116, %115 : vector<2x32xf32>
      %118 = arith.divf %116, %117 : vector<2x32xf32>
      %119 = arith.mulf %110, %88 : vector<2x32xf32>
      %120 = arith.mulf %104, %112 : vector<2x32xf32>
      %121 = arith.addf %119, %120 : vector<2x32xf32>
      %122 = math.tanh %121 : vector<2x32xf32>
      %123 = arith.mulf %118, %122 : vector<2x32xf32>
      %c1 = arith.constant 1 : index
      %c0_57 = arith.constant 0 : index
      %c0_58 = arith.constant 0 : index
      %124 = vector.load %arg14[%c1, %c0_57, %c0_58] : memref<2x2x32xf32, #tpu.memory_space<vmem>>, vector<1x2x32xf32>
      %125 = vector.shape_cast %124 : vector<1x2x32xf32> to vector<2x32xf32>
      %126 = vector.shape_cast %123 : vector<2x32xf32> to vector<1x2x32xf32>
      tpu.vector_store %arg14[%c1, %c0_57, %c0_58], %126 {strides = array<i32>} : memref<2x2x32xf32, #tpu.memory_space<vmem>>, vector<1x2x32xf32>,
      %c1_59 = arith.constant 1 : index
      %c0_60 = arith.constant 0 : index
      %c0_61 = arith.constant 0 : index
      %127 = vector.load %arg15[%c1_59, %c0_60, %c0_61] : memref<2x2x32xf32, #tpu.memory_space<vmem>>, vector<1x2x32xf32>
      %128 = vector.shape_cast %127 : vector<1x2x32xf32> to vector<2x32xf32>
      %129 = vector.shape_cast %121 : vector<2x32xf32> to vector<1x2x32xf32>
      tpu.vector_store %arg15[%c1_59, %c0_60, %c0_61], %129 {strides = array<i32>} : memref<2x2x32xf32, #tpu.memory_space<vmem>>, vector<1x2x32xf32>,
      %130 = arith.truncf %123 : vector<2x32xf32> to vector<2x32xbf16>
      %c0_62 = arith.constant 0 : index
      %c0_63 = arith.constant 0 : index
      %131 = vector.load %arg18[%c0_62, %c0_63] : memref<2x32xbf16, #tpu.memory_space<vmem>>, vector<2x32xbf16>
      tpu.vector_store %arg18[%c0_62, %c0_63], %130 {strides = array<i32>} : memref<2x32xbf16, #tpu.memory_space<vmem>>, vector<2x32xbf16>,
    } else {
    }
    %c0 = arith.constant 0 : index
    %c0_1 = arith.constant 0 : index
    %3 = vector.load %arg18[%c0, %c0_1] : memref<2x32xbf16, #tpu.memory_space<vmem>>, vector<2x32xbf16>
    %c0_2 = arith.constant 0 : index
    %c0_3 = arith.constant 0 : index
    %4 = vector.load %arg12[%c0_2, %c0_3] : memref<32x128xbf16, #tpu.memory_space<vmem>>, vector<32x128xbf16>
    %cst = arith.constant dense<0.000000e+00> : vector<2x128xf32>
    %5 = tpu.matmul %3, %4, %cst {dimension_numbers = #tpu.dot_dimension_numbers<[1], [0], [0], [1], [0, 0, 1, 1], [], []>} : vector<2x32xbf16>, vector<32x128xbf16>, vector<2x128xf32> -> vector<2x128xf32>
    %c0_4 = arith.constant 0 : index
    %c0_5 = arith.constant 0 : index
    %6 = vector.load %arg13[%c0_4, %c0_5] : memref<1x128xf32, #tpu.memory_space<vmem>>, vector<1x128xf32>
    %7 = vector.broadcast %6 : vector<1x128xf32> to vector<2x128xf32>
    %8 = arith.addf %5, %7 : vector<2x128xf32>
    %c0_6 = arith.constant 0 : index
    %c0_7 = arith.constant 0 : index
    %9 = vector.load %arg17[%c0_6, %c0_7] : memref<2x128xf32, #tpu.memory_space<vmem>>, vector<2x128xf32>
    tpu.vector_store %arg17[%c0_6, %c0_7], %8 {strides = array<i32>} : memref<2x128xf32, #tpu.memory_space<vmem>>, vector<2x128xf32>,
    return
  }
  func.func @transform_0(%arg0: i32) -> (i32, i32) {
    %c0_i32 = arith.constant 0 : i32
    %c0_i32_0 = arith.constant 0 : i32
    %c0_i32_1 = arith.constant 0 : i32
    return %c0_i32, %c0_i32_0 : i32, i32
  }
  func.func @transform_1(%arg0: i32) -> (i32, i32, i32) {
    %c0_i32 = arith.constant 0 : i32
    %c0_i32_0 = arith.constant 0 : i32
    %c0_i32_1 = arith.constant 0 : i32
    %c0_i32_2 = arith.constant 0 : i32
    return %c0_i32, %c0_i32_0, %c0_i32_1 : i32, i32, i32
  }
  func.func @transform_2(%arg0: i32) -> (i32, i32, i32) {
    %c0_i32 = arith.constant 0 : i32
    %c0_i32_0 = arith.constant 0 : i32
    %c0_i32_1 = arith.constant 0 : i32
    %c0_i32_2 = arith.constant 0 : i32
    return %c0_i32, %c0_i32_0, %c0_i32_1 : i32, i32, i32
  }
  func.func @transform_3(%arg0: i32) -> (i32, i32, i32) {
    %c0_i32 = arith.constant 0 : i32
    %c0_i32_0 = arith.constant 0 : i32
    %c0_i32_1 = arith.constant 0 : i32
    %c0_i32_2 = arith.constant 0 : i32
    return %c0_i32, %c0_i32_0, %c0_i32_1 : i32, i32, i32
  }
  func.func @transform_4(%arg0: i32) -> (i32, i32) {
    %c0_i32 = arith.constant 0 : i32
    %c0_i32_0 = arith.constant 0 : i32
    %c0_i32_1 = arith.constant 0 : i32
    return %c0_i32, %c0_i32_0 : i32, i32
  }
  func.func @transform_5(%arg0: i32) -> (i32, i32) {
    %c0_i32 = arith.constant 0 : i32
    %c0_i32_0 = arith.constant 0 : i32
    %c0_i32_1 = arith.constant 0 : i32
    return %c0_i32, %c0_i32_0 : i32, i32
  }
  func.func @transform_6(%arg0: i32) -> (i32, i32) {
    %c0_i32 = arith.constant 0 : i32
    %c0_i32_0 = arith.constant 0 : i32
    %c0_i32_1 = arith.constant 0 : i32
    return %c0_i32, %c0_i32_0 : i32, i32
  }
  func.func @transform_7(%arg0: i32) -> (i32, i32) {
    %c0_i32 = arith.constant 0 : i32
    %c0_i32_0 = arith.constant 0 : i32
    %c0_i32_1 = arith.constant 0 : i32
    return %c0_i32, %c0_i32_0 : i32, i32
  }
  func.func @transform_8(%arg0: i32) -> (i32, i32) {
    %c0_i32 = arith.constant 0 : i32
    %c0_i32_0 = arith.constant 0 : i32
    %c0_i32_1 = arith.constant 0 : i32
    return %c0_i32, %c0_i32_0 : i32, i32
  }
  func.func @transform_9(%arg0: i32) -> (i32, i32) {
    %c0_i32 = arith.constant 0 : i32
    %c0_i32_0 = arith.constant 0 : i32
    %c0_i32_1 = arith.constant 0 : i32
    return %c0_i32, %c0_i32_0 : i32, i32
  }
  func.func @transform_10(%arg0: i32) -> (i32, i32) {
    %c0_i32 = arith.constant 0 : i32
    %c0_i32_0 = arith.constant 0 : i32
    %c0_i32_1 = arith.constant 0 : i32
    return %c0_i32, %c0_i32_0 : i32, i32
  }
  func.func @transform_11(%arg0: i32) -> (i32, i32) {
    %c0_i32 = arith.constant 0 : i32
    %c0_i32_0 = arith.constant 0 : i32
    return %c0_i32, %arg0 : i32, i32
  }
  func.func @transform_12(%arg0: i32) -> (i32, i32) {
    %c0_i32 = arith.constant 0 : i32
    %c0_i32_0 = arith.constant 0 : i32
    return %c0_i32, %arg0 : i32, i32
  }
  func.func @transform_13(%arg0: i32) -> (i32, i32, i32) {
    %c0_i32 = arith.constant 0 : i32
    %c0_i32_0 = arith.constant 0 : i32
    %c0_i32_1 = arith.constant 0 : i32
    %c0_i32_2 = arith.constant 0 : i32
    return %c0_i32, %c0_i32_0, %c0_i32_1 : i32, i32, i32
  }
  func.func @transform_14(%arg0: i32) -> (i32, i32, i32) {
    %c0_i32 = arith.constant 0 : i32
    %c0_i32_0 = arith.constant 0 : i32
    %c0_i32_1 = arith.constant 0 : i32
    %c0_i32_2 = arith.constant 0 : i32
    return %c0_i32, %c0_i32_0, %c0_i32_1 : i32, i32, i32
  }
  func.func @transform_15(%arg0: i32) -> (i32, i32) {
    %c0_i32 = arith.constant 0 : i32
    %c0_i32_0 = arith.constant 0 : i32
    %c0_i32_1 = arith.constant 0 : i32
    return %c0_i32, %c0_i32_0 : i32, i32
  }
  func.func @transform_16(%arg0: i32) -> (i32, i32) {
    %c0_i32 = arith.constant 0 : i32
    %c0_i32_0 = arith.constant 0 : i32
    return %c0_i32, %arg0 : i32, i32
  }
}

</mosaic_0001>

<llo_original>
// kernel: dance_decoder_step.1
$region0: #{dance_decoder_step.1}
  #allocation0 [shape = 'u32[]', space=smem, size = 0x4, offset = 0x4, fixed_abs, tag = 'smem constant byte address 0x4 - core index']
  #allocation1 [shape = 'u32[72,128]{1,0:T(1,128)}', space=vmem, size = 0x9000, scoped, tag = 'internal scratch']
  #allocation2 [shape = 'bf16[2,32]{1,0:T(2,128)(2,1)}', space=vmem, size = 0x200, scoped, tag = 'scratch operand']
  %s0 = inlined_call_operand.vmem [shape: f32[2,32], index: 0, kind: input, shape index: {}]
  %s1 = inlined_call_operand.vmem [shape: f32[2,2,32], index: 1, kind: input, shape index: {}, may-alias: {1,13}]
  %s2 = inlined_call_operand.vmem [shape: f32[2,2,32], index: 2, kind: input, shape index: {}, may-alias: {2,14}]
  %s3 = inlined_call_operand.vmem [shape: f32[2,128,32], index: 3, kind: input, shape index: {}]
  %s4 = inlined_call_operand.vmem [shape: bf16[32,128], index: 4, kind: input, shape index: {}]
  %s5 = inlined_call_operand.vmem [shape: bf16[32,128], index: 5, kind: input, shape index: {}]
  %s6 = inlined_call_operand.vmem [shape: bf16[32,128], index: 6, kind: input, shape index: {}]
  %s7 = inlined_call_operand.vmem [shape: f32[1,128], index: 7, kind: input, shape index: {}]
  %s8 = inlined_call_operand.vmem [shape: bf16[32,128], index: 8, kind: input, shape index: {}]
  %s9 = inlined_call_operand.vmem [shape: bf16[32,128], index: 9, kind: input, shape index: {}]
  %s10 = inlined_call_operand.vmem [shape: f32[1,128], index: 10, kind: input, shape index: {}]
  %s11 = inlined_call_operand.vmem [shape: bf16[32,128], index: 11, kind: input, shape index: {}]
  %s12 = inlined_call_operand.vmem [shape: f32[1,128], index: 12, kind: input, shape index: {}]
  %s13 = inlined_call_operand.vmem [shape: f32[2,2,32], index: 13, kind: output, shape index: {0}, may-alias: {1,13}]
  %s14 = inlined_call_operand.vmem [shape: f32[2,2,32], index: 14, kind: output, shape index: {1}, may-alias: {2,14}]
  %s15 = inlined_call_operand.hbm [shape: f32[2,128], index: 15, kind: output, shape index: {2}]
  %s16 = inlined_call_operand.hbm [shape: f32[2,128], index: 16, kind: output, shape index: {3}]
  %17 = xla_tuple %s13, %s14, %s15, %s16
  %s18 = sld [smem:[#allocation0]]
  $region90: #{dance_decoder_step.1} parent=0
    _
  %s20 = ssub.s32 1, %s18
  %s21 = scalar_select 0, %s20, %s18
  $region1: #{dance_decoder_step.1} parent=0
    #allocation3 [shape = 'u8[1024]{0}', space=vmem, size = 0x400, scoped, tag = 'output window, operand 2, single buffered']
    #allocation4 [shape = 's32[1]{0}', space=sflag, size = 0x4, scoped, tag = 'scoped memory for dance_decoder_step.1']
    #allocation5 [shape = 'u8[1024]{0}', space=vmem, size = 0x400, scoped, tag = 'output window, operand 3, single buffered']
    #allocation6 [shape = 's32[1]{0}', space=sflag, size = 0x4, scoped, tag = 'scoped memory for dance_decoder_step.1']
    %22 = vsyncpa [#allocation4], 0
    %23 = vsyncpa [#allocation6], 0
    // Predicated region
    $region2: #{dance_decoder_step.1} parent=1 // pred_check
      _
    $region3: #{dance_decoder_step.1} parent=1 // pred_check_branch
      %25 = sbr.rel (0) target = $region5
    $region4: #{dance_decoder_step.1} parent=1 // pred_region
      _
    $region5: #{dance_decoder_step.1} parent=1 // pred_fallthru
      _
    // Predicated region
    $region6: #{dance_decoder_step.1} parent=1 // pred_check
      _
    $region7: #{dance_decoder_step.1} parent=1 // pred_check_branch
      %27 = sbr.rel (0) target = $region9
    $region8: #{dance_decoder_step.1} parent=1 // pred_region
      _
    $region9: #{dance_decoder_step.1} parent=1 // pred_fallthru
      _
    // Predicated region
    $region10: #{dance_decoder_step.1} parent=1 // pred_check
      _
    $region11: #{dance_decoder_step.1} parent=1 // pred_check_branch
      %29 = sbr.rel (0) target = $region13
    $region12: #{dance_decoder_step.1} parent=1 // pred_region
      _
    $region13: #{dance_decoder_step.1} parent=1 // pred_fallthru
      _
    // Predicated region
    $region14: #{dance_decoder_step.1} parent=1 // pred_check
      _
    $region15: #{dance_decoder_step.1} parent=1 // pred_check_branch
      %31 = sbr.rel (0) target = $region17
    $region16: #{dance_decoder_step.1} parent=1 // pred_region
      _
    $region17: #{dance_decoder_step.1} parent=1 // pred_fallthru
      _
    // Predicated region
    $region18: #{dance_decoder_step.1} parent=1 // pred_check
      _
    $region19: #{dance_decoder_step.1} parent=1 // pred_check_branch
      %33 = sbr.rel (0) target = $region21
    $region20: #{dance_decoder_step.1} parent=1 // pred_region
      _
    $region21: #{dance_decoder_step.1} parent=1 // pred_fallthru
      _
    // Predicated region
    $region22: #{dance_decoder_step.1} parent=1 // pred_check
      _
    $region23: #{dance_decoder_step.1} parent=1 // pred_check_branch
      %35 = sbr.rel (0) target = $region25
    $region24: #{dance_decoder_step.1} parent=1 // pred_region
      _
    $region25: #{dance_decoder_step.1} parent=1 // pred_fallthru
      _
    // Predicated region
    $region26: #{dance_decoder_step.1} parent=1 // pred_check
      _
    $region27: #{dance_decoder_step.1} parent=1 // pred_check_branch
      %37 = sbr.rel (0) target = $region29
    $region28: #{dance_decoder_step.1} parent=1 // pred_region
      _
    $region29: #{dance_decoder_step.1} parent=1 // pred_fallthru
      _
    // Predicated region
    $region30: #{dance_decoder_step.1} parent=1 // pred_check
      _
    $region31: #{dance_decoder_step.1} parent=1 // pred_check_branch
      %39 = sbr.rel (0) target = $region33
    $region32: #{dance_decoder_step.1} parent=1 // pred_region
      _
    $region33: #{dance_decoder_step.1} parent=1 // pred_fallthru
      _
    // Predicated region
    $region34: #{dance_decoder_step.1} parent=1 // pred_check
      _
    $region35: #{dance_decoder_step.1} parent=1 // pred_check_branch
      %41 = sbr.rel (0) target = $region37
    $region36: #{dance_decoder_step.1} parent=1 // pred_region
      _
    $region37: #{dance_decoder_step.1} parent=1 // pred_fallthru
      _
    // Predicated region
    $region38: #{dance_decoder_step.1} parent=1 // pred_check
      _
    $region39: #{dance_decoder_step.1} parent=1 // pred_check_branch
      %43 = sbr.rel (0) target = $region41
    $region40: #{dance_decoder_step.1} parent=1 // pred_region
      _
    $region41: #{dance_decoder_step.1} parent=1 // pred_fallthru
      _
    // Predicated region
    $region42: #{dance_decoder_step.1} parent=1 // pred_check
      _
    $region43: #{dance_decoder_step.1} parent=1 // pred_check_branch
      %45 = sbr.rel (0) target = $region45
    $region44: #{dance_decoder_step.1} parent=1 // pred_region
      _
    $region45: #{dance_decoder_step.1} parent=1 // pred_fallthru
      _
    // Predicated region
    $region46: #{dance_decoder_step.1} parent=1 // pred_check
      _
    $region47: #{dance_decoder_step.1} parent=1 // pred_check_branch
      %47 = sbr.rel (0) target = $region49
    $region48: #{dance_decoder_step.1} parent=1 // pred_region
      _
    $region49: #{dance_decoder_step.1} parent=1 // pred_fallthru
      _
    // Predicated region
    $region50: #{dance_decoder_step.1} parent=1 // pred_check
      _
    $region51: #{dance_decoder_step.1} parent=1 // pred_check_branch
      %49 = sbr.rel (0) target = $region53
    $region52: #{dance_decoder_step.1} parent=1 // pred_region
      _
    $region53: #{dance_decoder_step.1} parent=1 // pred_fallthru
      _
    %p51 = scmp.eq.s32.totalorder 0, 0
    // Predicated region
    $region54: #{dance_decoder_step.1} parent=1 // pred_check
      %p52 = pneg %p51
    $region55: #{dance_decoder_step.1} parent=1 // pred_check_branch
      %54 = sbr.rel (%p52) target = $region57
    $region56: #{dance_decoder_step.1} parent=1 // pred_region
      %v55 = vld [vmem:[%s0] sm:$0x3]
      %v56 = vld [vmem:[%s3] sm:$0xff]
      %v57 = vld [vmem:[%s3 + $0x8] sm:$0xff]
      %v58 = vld [vmem:[%s3 + $0x10] sm:$0xff]
      %v59 = vld [vmem:[%s3 + $0x18] sm:$0xff]
      %v60 = vld [vmem:[%s3 + $0x20] sm:$0xff]
      %v61 = vld [vmem:[%s3 + $0x28] sm:$0xff]
      %v62 = vld [vmem:[%s3 + $0x30] sm:$0xff]
      %v63 = vld [vmem:[%s3 + $0x38] sm:$0xff]
      %v64 = vld [vmem:[%s3 + $0x40] sm:$0xff]
      %v65 = vld [vmem:[%s3 + $0x48] sm:$0xff]
      %v66 = vld [vmem:[%s3 + $0x50] sm:$0xff]
      %v67 = vld [vmem:[%s3 + $0x58] sm:$0xff]
      %v68 = vld [vmem:[%s3 + $0x60] sm:$0xff]
      %v69 = vld [vmem:[%s3 + $0x68] sm:$0xff]
      %v70 = vld [vmem:[%s3 + $0x70] sm:$0xff]
      %v71 = vld [vmem:[%s3 + $0x78] sm:$0xff]
      %v72 = vld [vmem:[%s3 + $0x80] sm:$0xff]
      %v73 = vld [vmem:[%s3 + $0x88] sm:$0xff]
      %v74 = vld [vmem:[%s3 + $0x90] sm:$0xff]
      %v75 = vld [vmem:[%s3 + $0x98] sm:$0xff]
      %v76 = vld [vmem:[%s3 + $0xa0] sm:$0xff]
      %v77 = vld [vmem:[%s3 + $0xa8] sm:$0xff]
      %v78 = vld [vmem:[%s3 + $0xb0] sm:$0xff]
      %v79 = vld [vmem:[%s3 + $0xb8] sm:$0xff]
      %v80 = vld [vmem:[%s3 + $0xc0] sm:$0xff]
      %v81 = vld [vmem:[%s3 + $0xc8] sm:$0xff]
      %v82 = vld [vmem:[%s3 + $0xd0] sm:$0xff]
      %v83 = vld [vmem:[%s3 + $0xd8] sm:$0xff]
      %v84 = vld [vmem:[%s3 + $0xe0] sm:$0xff]
      %v85 = vld [vmem:[%s3 + $0xe8] sm:$0xff]
      %v86 = vld [vmem:[%s3 + $0xf0] sm:$0xff]
      %v87 = vld [vmem:[%s3 + $0xf8] sm:$0xff]
      %v88 = vld [vmem:[%s1] sm:$0x3]
      %v89 = vld [vmem:[%s1 + $0x2] sm:$0x3]
      %v90 = vld [vmem:[%s2] sm:$0x3]
      %v91 = vld [vmem:[%s2 + $0x2] sm:$0x3]
      %v93 = vrot.slane %v89, 1
      %vm94 = vcmask 261120
      %v95 = vsel %vm94, %v89, 0
      %v98 = vsel %vm94, %v56, 0
      %v101 = vsel %vm94, %v57, 0
      %v104 = vsel %vm94, %v58, 0
      %v107 = vsel %vm94, %v59, 0
      %v110 = vsel %vm94, %v60, 0
      %v113 = vsel %vm94, %v61, 0
      %v116 = vsel %vm94, %v62, 0
      %v119 = vsel %vm94, %v63, 0
      %v122 = vsel %vm94, %v64, 0
      %v125 = vsel %vm94, %v65, 0
      %v128 = vsel %vm94, %v66, 0
      %v131 = vsel %vm94, %v67, 0
      %v134 = vsel %vm94, %v68, 0
      %v137 = vsel %vm94, %v69, 0
      %v140 = vsel %vm94, %v70, 0
      %v143 = vsel %vm94, %v71, 0
      %145 = vmatpush.xpose.msra.mxu0 %v143
      %146 = vmatpush.xpose.msra.mxu0 %v140
      %147 = vmatpush.xpose.msra.mxu0 %v137
      %148 = vmatpush.xpose.msra.mxu0 %v134
      %149 = vmatpush.xpose.msra.mxu0 %v131
      %150 = vmatpush.xpose.msra.mxu0 %v128
      %151 = vmatpush.xpose.msra.mxu0 %v125
      %152 = vmatpush.xpose.msra.mxu0 %v122
      %153 = vmatpush.xpose.msra.mxu0 %v119
      %154 = vmatpush.xpose.msra.mxu0 %v116
      %155 = vmatpush.xpose.msra.mxu0 %v113
      %156 = vmatpush.xpose.msra.mxu0 %v110
      %157 = vmatpush.xpose.msra.mxu0 %v107
      %158 = vmatpush.xpose.msra.mxu0 %v104
      %159 = vmatpush.xpose.msra.mxu0 %v101
      %160 = vmatpush.xpose.msra.mxu0 %v98
      %161 = vmatmul.f32.gmra.mxu0 %v95
      %v162 = vpop.f32.mrf.mxu0
      %v163 = vadd.f32 0.0, %v162
      %164 = vdwg.mxu0
      %v165 = vsel %vm94, %v93, 0
      %v168 = vsel %vm94, %v72, 0
      %v171 = vsel %vm94, %v73, 0
      %v174 = vsel %vm94, %v74, 0
      %v177 = vsel %vm94, %v75, 0
      %v180 = vsel %vm94, %v76, 0
      %v183 = vsel %vm94, %v77, 0
      %v186 = vsel %vm94, %v78, 0
      %v189 = vsel %vm94, %v79, 0
      %v192 = vsel %vm94, %v80, 0
      %v195 = vsel %vm94, %v81, 0
      %v198 = vsel %vm94, %v82, 0
      %v201 = vsel %vm94, %v83, 0
      %v204 = vsel %vm94, %v84, 0
      %v207 = vsel %vm94, %v85, 0
      %v210 = vsel %vm94, %v86, 0
      %v213 = vsel %vm94, %v87, 0
      %215 = vmatpush.xpose.msra.mxu0 %v213
      %216 = vmatpush.xpose.msra.mxu0 %v210
      %217 = vmatpush.xpose.msra.mxu0 %v207
      %218 = vmatpush.xpose.msra.mxu0 %v204
      %219 = vmatpush.xpose.msra.mxu0 %v201
      %220 = vmatpush.xpose.msra.mxu0 %v198
      %221 = vmatpush.xpose.msra.mxu0 %v195
      %222 = vmatpush.xpose.msra.mxu0 %v192
      %223 = vmatpush.xpose.msra.mxu0 %v189
      %224 = vmatpush.xpose.msra.mxu0 %v186
      %225 = vmatpush.xpose.msra.mxu0 %v183
      %226 = vmatpush.xpose.msra.mxu0 %v180
      %227 = vmatpush.xpose.msra.mxu0 %v177
      %228 = vmatpush.xpose.msra.mxu0 %v174
      %229 = vmatpush.xpose.msra.mxu0 %v171
      %230 = vmatpush.xpose.msra.mxu0 %v168
      %231 = vmatmul.f32.gmra.mxu0 %v165
      %v232 = vpop.f32.mrf.mxu0
      %v233 = vadd.f32 0.0, %v232
      %234 = vdwg.mxu0
      %v235 = vlaneseq
      %v236 = vand.u32 %v235, 127
      %vm237 = vcmp.lt.s32.totalorder %v236, 8
      %v238 = vsel %vm237, %v163, -1e+30
      %v239 = vsel %vm237, %v233, -1e+30
      %vm240 = vcmask 1040384
      %v241 = vsel %vm240, %v238, -inf
      %242 = vmax.xlane.f32.xlu0 %v241
      %v243 = vpop.xlane.xlu0 %242
      %v244 = vsel %vm240, %v239, -inf
      %245 = vmax.xlane.f32.xlu0 %v244
      %v246 = vpop.xlane.xlu0 %245
      %v247 = vsub.f32 %v238, %v243
      %v248 = vsub.f32 %v239, %v246
      %v249 = vmul.f32 %v247, 1.442695
      %v250 = vpow.pop %v249
      %v251 = vmul.f32 %v248, 1.442695
      %v252 = vpow.pop %v251
      %v253 = vsel %vm240, %v250, 0.0
      %254 = vadd.xlane.f32.xlu0 %v253
      %v255 = vpop.xlane.xlu0 %254
      %v256 = vsel %vm240, %v252, 0.0
      %257 = vadd.xlane.f32.xlu0 %v256
      %v258 = vpop.xlane.xlu0 %257
      %v259 = vrcp.pop %v255
      %v260 = vmul.f32 %v255, %v259
      %v261 = vsub.f32 1.0, %v260
      %v262 = vmul.f32 %v259, %v261
      %v263 = vadd.f32 %v259, %v262
      %vm264 = vweird.f32 %v255
      %vm265 = vweird.f32 %v259
      %vm266 = vmor %vm264, %vm265
      %v267 = vsel %vm266, %v259, %v263
      %v268 = vand.u32 2147483647, %v255
      %vm269 = vcmp.eq.f32.partialorder %v268, 8.507059e+37
      %v270 = vand.u32 %v255, 2147483648
      %v271 = vor.u32 1.1754944e-38, %v270
      %v272 = vsel %vm269, %v271, %v267
      %v273 = vmul.f32 %v250, %v272
      %v274 = vrcp.pop %v258
      %v275 = vmul.f32 %v258, %v274
      %v276 = vsub.f32 1.0, %v275
      %v277 = vmul.f32 %v274, %v276
      %v278 = vadd.f32 %v274, %v277
      %vm279 = vweird.f32 %v258
      %vm280 = vweird.f32 %v274
      %vm281 = vmor %vm279, %vm280
      %v282 = vsel %vm281, %v274, %v278
      %v283 = vand.u32 2147483647, %v258
      %vm284 = vcmp.eq.f32.partialorder %v283, 8.507059e+37
      %v285 = vand.u32 %v258, 2147483648
      %v286 = vor.u32 1.1754944e-38, %v285
      %v287 = vsel %vm284, %v286, %v282
      %v288 = vmul.f32 %v252, %v287
      %v291 = vrot.slane %v288, 7
      %vm292 = vcmask 1041409
      %v293 = vsel %vm292, %v291, %v273
      %295 = vst [vmem:[#allocation3] sm:$0x3] %v293
      %296 = vmatpush.msra.mxu0 %v71
      %297 = vmatpush.msra.mxu0 %v70
      %298 = vmatpush.msra.mxu0 %v69
      %299 = vmatpush.msra.mxu0 %v68
      %300 = vmatpush.msra.mxu0 %v67
      %301 = vmatpush.msra.mxu0 %v66
      %302 = vmatpush.msra.mxu0 %v65
      %303 = vmatpush.msra.mxu0 %v64
      %304 = vmatpush.msra.mxu0 %v63
      %305 = vmatpush.msra.mxu0 %v62
      %306 = vmatpush.msra.mxu0 %v61
      %307 = vmatpush.msra.mxu0 %v60
      %308 = vmatpush.msra.mxu0 %v59
      %309 = vmatpush.msra.mxu0 %v58
      %310 = vmatpush.msra.mxu0 %v57
      %311 = vmatpush.msra.mxu0 %v56
      %312 = vmatmul.f32.gmra.mxu0 %v273
      %v313 = vpop.f32.mrf.mxu0
      %v314 = vadd.f32 0.0, %v313
      %315 = vdwg.mxu0
      %316 = vmatpush.msra.mxu0 %v87
      %317 = vmatpush.msra.mxu0 %v86
      %318 = vmatpush.msra.mxu0 %v85
      %319 = vmatpush.msra.mxu0 %v84
      %320 = vmatpush.msra.mxu0 %v83
      %321 = vmatpush.msra.mxu0 %v82
      %322 = vmatpush.msra.mxu0 %v81
      %323 = vmatpush.msra.mxu0 %v80
      %324 = vmatpush.msra.mxu0 %v79
      %325 = vmatpush.msra.mxu0 %v78
      %326 = vmatpush.msra.mxu0 %v77
      %327 = vmatpush.msra.mxu0 %v76
      %328 = vmatpush.msra.mxu0 %v75
      %329 = vmatpush.msra.mxu0 %v74
      %330 = vmatpush.msra.mxu0 %v73
      %331 = vmatpush.msra.mxu0 %v72
      %332 = vmatmul.f32.gmra.mxu0 %v288
      %v333 = vpop.f32.mrf.mxu0
      %v334 = vadd.f32 0.0, %v333
      %335 = vdwg.mxu0
      %v336 = vpack.c.bf16 %v55, %v55
      %v337 = vld [vmem:[%s4] sm:$0xf]
      %v338 = vld [vmem:[%s4 + $0x4] sm:$0xf]
      %v339 = vld [vmem:[%s4 + $0x8] sm:$0xf]
      %v340 = vld [vmem:[%s4 + $0xc] sm:$0xf]
      %v341 = vpack.c.bf16 %v314, %v314
      %v342 = vpack.c.bf16 %v334, %v334
      %v343 = vld [vmem:[%s5] sm:$0xf]
      %v344 = vld [vmem:[%s5 + $0x4] sm:$0xf]
      %v345 = vld [vmem:[%s5 + $0x8] sm:$0xf]
      %v346 = vld [vmem:[%s5 + $0xc] sm:$0xf]
      %v349 = vunpack.c.l.b16 %v341
      %v350 = vunpack.c.l.b16 %v342
      %v351 = vrot.slane %v350, 7
      %v352 = vsel %vm292, %v351, %v349
      %v353 = vpack.c.b16 %v352, %v352
      %v358 = vunpack.c.l.b16 %v343
      %v359 = vunpack.c.l.b16 %v344
      %v360 = vunpack.c.l.b16 %v345
      %v361 = vunpack.c.l.b16 %v346
      %v362 = vpack.c.b16 %v359, %v358
      %v363 = vpack.c.b16 %v361, %v360
      %v367 = vsel %vm94, %v353, 0
      %369 = vmatpush.bf16.msra.mxu0 0
      %370 = vmatpush.bf16.msra.mxu0 0
      %371 = vmatpush.bf16.msra.mxu0 0
      %372 = vmatpush.bf16.msra.mxu0 0
      %373 = vmatpush.bf16.msra.mxu0 0
      %374 = vmatpush.bf16.msra.mxu0 0
      %375 = vmatpush.bf16.msra.mxu0 %v363
      %376 = vmatpush.bf16.msra.mxu0 %v362
      %377 = vmatmul.bf16.gmra.mxu0 %v367
      %v378 = vpop.f32.mrf.mxu0
      %v379 = vadd.f32 0.0, %v378
      %v380 = vpop.f32.mrf.mxu0
      %381 = vdwg.mxu0
      %v386 = vunpack.c.l.b16 %v337
      %v387 = vunpack.c.l.b16 %v338
      %v388 = vunpack.c.l.b16 %v339
      %v389 = vunpack.c.l.b16 %v340
      %v390 = vpack.c.b16 %v387, %v386
      %v391 = vpack.c.b16 %v389, %v388
      %v395 = vsel %vm94, %v336, 0
      %397 = vmatpush.bf16.msra.mxu0 0
      %398 = vmatpush.bf16.msra.mxu0 0
      %399 = vmatpush.bf16.msra.mxu0 0
      %400 = vmatpush.bf16.msra.mxu0 0
      %401 = vmatpush.bf16.msra.mxu0 0
      %402 = vmatpush.bf16.msra.mxu0 0
      %403 = vmatpush.bf16.msra.mxu0 %v391
      %404 = vmatpush.bf16.msra.mxu0 %v390
      %405 = vmatmul.bf16.gmra.mxu0 %v395
      %v406 = vpop.f32.mrf.mxu0
      %v407 = vadd.f32 %v379, %v406
      %v408 = vpop.f32.mrf.mxu0
      %409 = vdwg.mxu0
      %v410 = vpack.c.bf16 %v88, %v88
      %v411 = vld [vmem:[%s6] sm:$0xf]
      %v412 = vld [vmem:[%s6 + $0x4] sm:$0xf]
      %v413 = vld [vmem:[%s6 + $0x8] sm:$0xf]
      %v414 = vld [vmem:[%s6 + $0xc] sm:$0xf]
      %v419 = vunpack.c.l.b16 %v411
      %v420 = vunpack.c.l.b16 %v412
      %v421 = vunpack.c.l.b16 %v413
      %v422 = vunpack.c.l.b16 %v414
      %v423 = vpack.c.b16 %v420, %v419
      %v424 = vpack.c.b16 %v422, %v421
      %v428 = vsel %vm94, %v410, 0
      %430 = vmatpush.bf16.msra.mxu0 0
      %431 = vmatpush.bf16.msra.mxu0 0
      %432 = vmatpush.bf16.msra.mxu0 0
      %433 = vmatpush.bf16.msra.mxu0 0
      %434 = vmatpush.bf16.msra.mxu0 0
      %435 = vmatpush.bf16.msra.mxu0 0
      %436 = vmatpush.bf16.msra.mxu0 %v424
      %437 = vmatpush.bf16.msra.mxu0 %v423
      %438 = vmatmul.bf16.gmra.mxu0 %v428
      %v439 = vpop.f32.mrf.mxu0
      %v440 = vadd.f32 0.0, %v439
      %v441 = vpop.f32.mrf.mxu0
      %442 = vdwg.mxu0
      %v443 = vadd.f32 %v407, %v440
      %v444 = vld [vmem:[%s7] sm:$0x1]
      %v446 = vperm.slane %v444, 0
      %v448 = vadd.f32 %v443, %v446
      %v449 = vxor.u32 %v448, 2147483648
      %v450 = vmul.f32 %v449, 1.442695
      %v451 = vpow.pop %v450
      %v452 = vadd.f32 %v451, 1.0
      %v453 = vrcp.pop %v452
      %v454 = vmul.f32 %v452, %v453
      %v455 = vsub.f32 1.0, %v454
      %v456 = vmul.f32 %v453, %v455
      %v457 = vadd.f32 %v453, %v456
      %vm458 = vweird.f32 %v452
      %vm459 = vweird.f32 %v453
      %vm460 = vmor %vm458, %vm459
      %v461 = vsel %vm460, %v453, %v457
      %v462 = vand.u32 2147483647, %v452
      %vm463 = vcmp.eq.f32.partialorder %v462, 8.507059e+37
      %v464 = vand.u32 %v452, 2147483648
      %v465 = vor.u32 1.1754944e-38, %v464
      %v466 = vsel %vm463, %v465, %v461
      %v467 = vmul.f32 1.0, %v466
      %v468 = vtanh.pop %v448
      %470 = vrot.lane.b32.xlu0 %v90, 32
      %v471 = vpop.permute.xlu0 %470
      %v473 = vmul.f32 %v467, %v471
      %475 = vrot.lane.b32.xlu0 %v468, 64
      %v476 = vpop.permute.xlu0 %475
      %v478 = vmul.f32 %v467, %v476
      %480 = vrot.lane.b32.xlu0 %v478, 32
      %v481 = vpop.permute.xlu0 %480
      %v483 = vadd.f32 %v473, %v481
      %v484 = vtanh.pop %v483
      %486 = vrot.lane.b32.xlu0 %v484, 64
      %v487 = vpop.permute.xlu0 %486
      %v489 = vmul.f32 %v467, %v487
      %491 = vrot.lane.b32.xlu0 %v489, 32
      %v492 = vpop.permute.xlu0 %491
      %vm494 = vcmask 254976
      %495 = vst.msk [vmem:[%s13] sm:$0x3] %vm494, %v492
      %497 = vrot.lane.b32.xlu0 %v483, 96
      %v498 = vpop.permute.xlu0 %497
      %500 = vst.msk [vmem:[%s14] sm:$0x3] %vm494, %v498
      %v501 = vpack.c.bf16 %v489, %v489
      %v502 = vld [vmem:[%s8] sm:$0xf]
      %v503 = vld [vmem:[%s8 + $0x4] sm:$0xf]
      %v504 = vld [vmem:[%s8 + $0x8] sm:$0xf]
      %v505 = vld [vmem:[%s8 + $0xc] sm:$0xf]
      %v506 = vpack.c.bf16 %v89, %v89
      %v507 = vld [vmem:[%s9] sm:$0xf]
      %v508 = vld [vmem:[%s9 + $0x4] sm:$0xf]
      %v509 = vld [vmem:[%s9 + $0x8] sm:$0xf]
      %v510 = vld [vmem:[%s9 + $0xc] sm:$0xf]
      %v515 = vunpack.c.l.b16 %v507
      %v516 = vunpack.c.l.b16 %v508
      %v517 = vunpack.c.l.b16 %v509
      %v518 = vunpack.c.l.b16 %v510
      %v519 = vpack.c.b16 %v516, %v515
      %v520 = vpack.c.b16 %v518, %v517
      %v524 = vsel %vm94, %v506, 0
      %526 = vmatpush.bf16.msra.mxu0 0
      %527 = vmatpush.bf16.msra.mxu0 0
      %528 = vmatpush.bf16.msra.mxu0 0
      %529 = vmatpush.bf16.msra.mxu0 0
      %530 = vmatpush.bf16.msra.mxu0 0
      %531 = vmatpush.bf16.msra.mxu0 0
      %532 = vmatpush.bf16.msra.mxu0 %v520
      %533 = vmatpush.bf16.msra.mxu0 %v519
      %534 = vmatmul.bf16.gmra.mxu0 %v524
      %v535 = vpop.f32.mrf.mxu0
      %v536 = vadd.f32 0.0, %v535
      %v537 = vpop.f32.mrf.mxu0
      %538 = vdwg.mxu0
      %540 = vrot.lane.b32.xlu0 %v501, 32
      %v541 = vpop.permute.xlu0 %540
      %v546 = vunpack.c.l.b16 %v502
      %v547 = vunpack.c.l.b16 %v503
      %v548 = vunpack.c.l.b16 %v504
      %v549 = vunpack.c.l.b16 %v505
      %v550 = vpack.c.b16 %v547, %v546
      %v551 = vpack.c.b16 %v549, %v548
      %v555 = vsel %vm94, %v541, 0
      %557 = vmatpush.bf16.msra.mxu0 0
      %558 = vmatpush.bf16.msra.mxu0 0
      %559 = vmatpush.bf16.msra.mxu0 0
      %560 = vmatpush.bf16.msra.mxu0 0
      %561 = vmatpush.bf16.msra.mxu0 0
      %562 = vmatpush.bf16.msra.mxu0 0
      %563 = vmatpush.bf16.msra.mxu0 %v551
      %564 = vmatpush.bf16.msra.mxu0 %v550
      %565 = vmatmul.bf16.gmra.mxu0 %v555
      %v566 = vpop.f32.mrf.mxu0
      %v567 = vadd.f32 %v536, %v566
      %v568 = vpop.f32.mrf.mxu0
      %569 = vdwg.mxu0
      %v570 = vld [vmem:[%s10] sm:$0x1]
      %v572 = vperm.slane %v570, 0
      %v574 = vadd.f32 %v567, %v572
      %v575 = vxor.u32 %v574, 2147483648
      %v576 = vmul.f32 %v575, 1.442695
      %v577 = vpow.pop %v576
      %v578 = vadd.f32 %v577, 1.0
      %v579 = vrcp.pop %v578
      %v580 = vmul.f32 %v578, %v579
      %v581 = vsub.f32 1.0, %v580
      %v582 = vmul.f32 %v579, %v581
      %v583 = vadd.f32 %v579, %v582
      %vm584 = vweird.f32 %v578
      %vm585 = vweird.f32 %v579
      %vm586 = vmor %vm584, %vm585
      %v587 = vsel %vm586, %v579, %v583
      %v588 = vand.u32 2147483647, %v578
      %vm589 = vcmp.eq.f32.partialorder %v588, 8.507059e+37
      %v590 = vand.u32 %v578, 2147483648
      %v591 = vor.u32 1.1754944e-38, %v590
      %v592 = vsel %vm589, %v591, %v587
      %v593 = vmul.f32 1.0, %v592
      %v594 = vtanh.pop %v574
      %596 = vrot.lane.b32.xlu0 %v91, 32
      %v597 = vpop.permute.xlu0 %596
      %v599 = vmul.f32 %v593, %v597
      %601 = vrot.lane.b32.xlu0 %v594, 64
      %v602 = vpop.permute.xlu0 %601
      %v604 = vmul.f32 %v593, %v602
      %606 = vrot.lane.b32.xlu0 %v604, 32
      %v607 = vpop.permute.xlu0 %606
      %v609 = vadd.f32 %v599, %v607
      %v610 = vtanh.pop %v609
      %612 = vrot.lane.b32.xlu0 %v610, 64
      %v613 = vpop.permute.xlu0 %612
      %v615 = vmul.f32 %v593, %v613
      %617 = vrot.lane.b32.xlu0 %v615, 32
      %v618 = vpop.permute.xlu0 %617
      %s620 = scalar_lea.vmem %s13, 2
      %621 = vst.msk [vmem:[%s620] sm:$0x3] %vm494, %v618
      %623 = vrot.lane.b32.xlu0 %v609, 96
      %v624 = vpop.permute.xlu0 %623
      %s626 = scalar_lea.vmem %s14, 2
      %627 = vst.msk [vmem:[%s626] sm:$0x3] %vm494, %v624
      %v628 = vpack.c.bf16 %v615, %v615
      %v630 = vrot.slane %v628, 3
      %v633 = vsel %vm240, %v628, %v630
      %635 = vrot.lane.b32.xlu0 %v633, 32
      %v636 = vpop.permute.xlu0 %635
      %vm638 = vcmask 253952
      %639 = vst.msk [vmem:[#allocation2] sm:$0x1] %vm638, %v636
    $region57: #{dance_decoder_step.1} parent=1 // pred_fallthru
      _
    %v640 = vld [vmem:[#allocation2] sm:$0x1]
    %v641 = vld [vmem:[%s11] sm:$0xf]
    %v642 = vld [vmem:[%s11 + $0x4] sm:$0xf]
    %v643 = vld [vmem:[%s11 + $0x8] sm:$0xf]
    %v644 = vld [vmem:[%s11 + $0xc] sm:$0xf]
    %v645 = vld [vmem:[%s12] sm:$0x1]
    %v647 = vperm.slane %v645, 0
    %v653 = vunpack.c.l.b16 %v641
    %v654 = vunpack.c.l.b16 %v642
    %v655 = vunpack.c.l.b16 %v643
    %v656 = vunpack.c.l.b16 %v644
    %v657 = vpack.c.b16 %v654, %v653
    %v658 = vpack.c.b16 %v656, %v655
    %vm661 = vcmask 261120
    %v663 = vsel %vm661, %v640, 0
    %665 = vmatpush.bf16.msra.mxu0 0
    %666 = vmatpush.bf16.msra.mxu0 0
    %667 = vmatpush.bf16.msra.mxu0 0
    %668 = vmatpush.bf16.msra.mxu0 0
    %669 = vmatpush.bf16.msra.mxu0 0
    %670 = vmatpush.bf16.msra.mxu0 0
    %671 = vmatpush.bf16.msra.mxu0 %v658
    %672 = vmatpush.bf16.msra.mxu0 %v657
    %673 = vmatmul.bf16.gmra.mxu0 %v663
    %v674 = vpop.f32.mrf.mxu0
    %v675 = vadd.f32 %v647, %v674
    %v676 = vpop.f32.mrf.mxu0
    %677 = vdwg.mxu0
    %678 = vst [vmem:[#allocation5] sm:$0x3] %v675
    // Predicated region
    $region58: #{dance_decoder_step.1} parent=1 // pred_check
      _
    $region59: #{dance_decoder_step.1} parent=1 // pred_check_branch
      %680 = sbr.rel (0) target = $region61
    $region60: #{dance_decoder_step.1} parent=1 // pred_region
      _
    $region61: #{dance_decoder_step.1} parent=1 // pred_fallthru
      _
    // Predicated region
    $region62: #{dance_decoder_step.1} parent=1 // pred_check
      _
    $region63: #{dance_decoder_step.1} parent=1 // pred_check_branch
      %682 = sbr.rel (0) target = $region65
    $region64: #{dance_decoder_step.1} parent=1 // pred_region
      _
    $region65: #{dance_decoder_step.1} parent=1 // pred_fallthru
      _
    // Predicated region
    $region66: #{dance_decoder_step.1} parent=1 // pred_check
      _
    $region67: #{dance_decoder_step.1} parent=1 // pred_check_branch
      %684 = sbr.rel (0) target = $region69
    $region68: #{dance_decoder_step.1} parent=1 // pred_region
      %686 = vsyncadd [#allocation4], 0
      %s688 = sshll.u32 [#allocation3], 4
      %s689 = int_to_ptr.vmem [resolvable:$true] %s688
      %s690 = sshll.u32 %s15, 4
      %s691 = int_to_ptr.hbm [resolvable:$true] %s690
      %693 = dma.vmem_to_hbm [thread:$0]  %s689, 32, %s691, [#allocation4]
    $region69: #{dance_decoder_step.1} parent=1 // pred_fallthru
      _
    // Predicated region
    $region70: #{dance_decoder_step.1} parent=1 // pred_check
      _
    $region71: #{dance_decoder_step.1} parent=1 // pred_check_branch
      %695 = sbr.rel (0) target = $region73
    $region72: #{dance_decoder_step.1} parent=1 // pred_region
      %697 = vsyncadd [#allocation6], 0
      %s699 = sshll.u32 [#allocation5], 4
      %s700 = int_to_ptr.vmem [resolvable:$true] %s699
      %s701 = sshll.u32 %s16, 4
      %s702 = int_to_ptr.hbm [resolvable:$true] %s701
      %704 = dma.vmem_to_hbm [thread:$0]  %s700, 32, %s702, [#allocation6]
    $region73: #{dance_decoder_step.1} parent=1 // pred_fallthru
      _
    // Predicated region
    $region74: #{dance_decoder_step.1} parent=1 // pred_check
      _
    $region75: #{dance_decoder_step.1} parent=1 // pred_check_branch
      %706 = sbr.rel (0) target = $region77
    $region76: #{dance_decoder_step.1} parent=1 // pred_region
      _
    $region77: #{dance_decoder_step.1} parent=1 // pred_fallthru
      _
    // Predicated region
    $region78: #{dance_decoder_step.1} parent=1 // pred_check
      _
    $region79: #{dance_decoder_step.1} parent=1 // pred_check_branch
      %708 = sbr.rel (0) target = $region81
    $region80: #{dance_decoder_step.1} parent=1 // pred_region
      _
    $region81: #{dance_decoder_step.1} parent=1 // pred_fallthru
      _
    // Predicated region
    $region82: #{dance_decoder_step.1} parent=1 // pred_check
      _
    $region83: #{dance_decoder_step.1} parent=1 // pred_check_branch
      %710 = sbr.rel (0) target = $region85
    $region84: #{dance_decoder_step.1} parent=1 // pred_region
      %712 = dma.done [#allocation4], 32
    $region85: #{dance_decoder_step.1} parent=1 // pred_fallthru
      _
    // Predicated region
    $region86: #{dance_decoder_step.1} parent=1 // pred_check
      _
    $region87: #{dance_decoder_step.1} parent=1 // pred_check_branch
      %714 = sbr.rel (0) target = $region89
    $region88: #{dance_decoder_step.1} parent=1 // pred_region
      %716 = dma.done [#allocation6], 32
    $region89: #{dance_decoder_step.1} parent=1 // pred_fallthru
      _
    %717 = vsyncpa [#allocation4], 1
    %718 = vsyncpa [#allocation6], 1

</llo_original>
